<compile_context>
chip_gen: v7x
topology: tpu7x:2x2x1
jax: 0.10.0
libtpu: 0.0.40
codegen_flags: <defaults>
</compile_context>

<pallas_src>
import functools

import jax
import jax.numpy as jnp
from jax.experimental import pallas as pl
from jax.experimental.pallas import tpu as pltpu

_LANE = 128


def _ce_kernel(x_ref, lab_ref, o_ref, acc_ref, *, valid_pixels, padded_pixels):
    """One (batch, row-block) tile of the pixel-wise cross-entropy sum.

    x_ref   : (1, C,  RB, 128)  logits tile (pixels flattened lane-dense)
    lab_ref : (1, CL, RB, 128)  label tile (argmax over CL gives target class)
    o_ref   : (1, 1, 1) f32     per-batch loss sum (written at last row block)
    acc_ref : (RB, 128) f32     running per-pixel loss accumulator (VMEM)
    """
    c = x_ref.shape[1]
    cl = lab_ref.shape[1]
    rb, lane = acc_ref.shape
    j = pl.program_id(1)

    @pl.when(j == 0)
    def _():
        acc_ref[...] = jnp.zeros_like(acc_ref)

    # ---- pass 1: channel max (re-reads the VMEM ref; keeps live set tiny) --
    m = x_ref[0, 0].astype(jnp.float32)
    for ci in range(1, c):
        m = jnp.maximum(m, x_ref[0, ci].astype(jnp.float32))

    # ---- pass 2: exp-sum + fused label-argmax / target-logit pick ----------
    # First-max tie-break (strict >) matches torch .max(1)[1]; label.long()
    # truncation is the int32 cast.
    x0 = x_ref[0, 0].astype(jnp.float32)
    s = jnp.exp(x0 - m)
    best = lab_ref[0, 0].astype(jnp.int32)
    tgt = x0
    for ci in range(1, c):
        xi = x_ref[0, ci].astype(jnp.float32)
        s = s + jnp.exp(xi - m)
        if ci < cl:
            li = lab_ref[0, ci].astype(jnp.int32)
            better = li > best
            best = jnp.where(better, li, best)
            tgt = jnp.where(better, xi, tgt)

    # per-pixel NLL = logsumexp - logit[target]
    loss = (m + jnp.log(s)) - tgt                       # (RB, 128)

    if padded_pixels != valid_pixels:
        # Mask out the tail pad pixels of the flattened H*W axis.
        row_ids = jax.lax.broadcasted_iota(jnp.int32, (rb, lane), 0)
        lane_ids = jax.lax.broadcasted_iota(jnp.int32, (rb, lane), 1)
        pix = (j * rb + row_ids) * lane + lane_ids
        loss = jnp.where(pix < valid_pixels, loss, 0.0)

    acc_ref[...] += loss

    @pl.when(j == pl.num_programs(1) - 1)
    def _():
        o_ref[...] = jnp.sum(acc_ref[...], keepdims=True)[None]


def _pick_row_block(r, c, cl, lane, *, budget_bytes=32 * 1024 * 1024,
                    max_rows_cap=32):
    """Row block RB: multiple of 8 dividing R (or R itself when R <= 8), capped
    so (a) the double-buffered working set 2*(C+CL)*RB*lane*4 + acc stays under
    budget_bytes and (b) the unrolled channel fold stays spill-free."""
    if r <= 8:
        return r
    per_row_bytes = (2 * (c + cl) + 1) * lane * 4
    max_rows = max(8, min(max_rows_cap, budget_bytes // per_row_bytes))
    rb = 8                                   # padded R > 8 is a multiple of 8
    cand = (max_rows // 8) * 8
    while cand >= 8:
        if r % cand == 0:
            rb = cand
            break
        cand -= 8
    return rb


def cross_entropy_loss(output, label):
    """Pallas equivalent of CrossEntropyLoss.forward(output, label).

    output : (N, C, H, W) logits
    label  : (N, CL, H, W); target class = label.long().max(1)[1], CL <= C
    Returns a scalar f32: mean cross-entropy over all N*H*W pixels.
    """
    n, c, h, w = output.shape
    nl, cl, hl, wl = label.shape
    assert (n, h, w) == (nl, hl, wl), "output/label batch & spatial dims must match"
    assert cl <= c, "label channels (target range) must not exceed logit channels"

    # ---- lane-dense layout: flatten pixels and reshape to (N, C, R, 128) ----
    p = h * w
    if p <= 8 * _LANE:
        padded = -(-p // _LANE) * _LANE                   # R <= 8
    else:
        padded = -(-p // (8 * _LANE)) * (8 * _LANE)       # R multiple of 8
    r = padded // _LANE

    x = output.reshape(n, c, p)
    lab = label.reshape(n, cl, p)
    if padded != p:
        x = jnp.pad(x, ((0, 0), (0, 0), (0, padded - p)))
        lab = jnp.pad(lab, ((0, 0), (0, 0), (0, padded - p)))
    x = x.reshape(n, c, r, _LANE)
    lab = lab.reshape(n, cl, r, _LANE)

    rb = _pick_row_block(r, c, cl, _LANE)
    grid = (n, r // rb)
    kernel = functools.partial(_ce_kernel, valid_pixels=p, padded_pixels=padded)

    partial_sums = pl.pallas_call(
        kernel,
        out_shape=jax.ShapeDtypeStruct((n, 1, 1), jnp.float32),
        grid=grid,
        in_specs=[
            pl.BlockSpec((1, c, rb, _LANE), lambda i, j: (i, 0, j, 0)),
            pl.BlockSpec((1, cl, rb, _LANE), lambda i, j: (i, 0, j, 0)),
        ],
        out_specs=pl.BlockSpec((1, 1, 1), lambda i, j: (i, 0, 0)),
        scratch_shapes=[pltpu.VMEM((rb, _LANE), jnp.float32)],
        compiler_params=pltpu.CompilerParams(
            # batch axis is independent (per-batch partial sums) -> megacore on
            # v7x; the row-block axis carries the accumulator -> arbitrary.
            dimension_semantics=("parallel", "arbitrary"),
            vmem_limit_bytes=48 * 1024 * 1024,
        ),
    )(x, lab)

    return jnp.sum(partial_sums) / jnp.float32(n * h * w)


if __name__ == "__main__":
    key = jax.random.PRNGKey(0)
    k_logits, k_cls = jax.random.split(key)

    # Small shapes consistent with the module: batch=2, label_nc=4, 16x16.
    n, label_nc, h, w = 2, 4, 16, 16
    logits = jax.random.normal(k_logits, (n, label_nc, h, w), jnp.float32)
    cls = jax.random.randint(k_cls, (n, h, w), 0, label_nc)
    label = jax.nn.one_hot(cls, label_nc, axis=1, dtype=jnp.float32)  # (N,C,H,W)

    loss = cross_entropy_loss(logits, label)
    loss = jax.block_until_ready(loss)

    # Pure-JAX reference: LogSoftmax(dim=1) + NLLLoss2d (mean over pixels).
    lab_idx = jnp.argmax(label.astype(jnp.int32), axis=1)           # (N, H, W)
    logp = jax.nn.log_softmax(logits, axis=1)
    ref = -jnp.mean(jnp.take_along_axis(logp, lab_idx[:, None], axis=1))

    assert bool(jnp.isfinite(loss))
    assert abs(float(loss) - float(ref)) < 1e-5, (float(loss), float(ref))

    print("KERNEL_OK")
</pallas_src>

<mosaic_0001>
module attributes {stable_mosaic.version = 11 : i64} {
  func.func @_ce_kernel(%arg0: i32, %arg1: i32, %arg2: memref<1x4x2x128xf32, #tpu.memory_space<vmem>>, %arg3: memref<1x4x2x128xf32, #tpu.memory_space<vmem>>, %arg4: memref<1x1x1xf32, #tpu.memory_space<vmem>>, %arg5: memref<2x128xf32, #tpu.memory_space<vmem>>) attributes {dimension_semantics = [#tpu.dimension_semantics<parallel>, #tpu.dimension_semantics<arbitrary>], iteration_bounds = array<i64: 2, 1>, scalar_prefetch = 0 : i64, scratch_operands = 1 : i64, tpu.core_type = #tpu.core_type<tc>, window_params = [{transform_indices = @transform_0, window_bounds = array<i64: 1, 4, 2, 128>}, {transform_indices = @transform_1, window_bounds = array<i64: 1, 4, 2, 128>}, {transform_indices = @transform_2, window_bounds = array<i64: 1, 1, 1>}]} {
    %c0_i32 = arith.constant 0 : i32
    %0 = arith.cmpi eq, %arg1, %c0_i32 : i32
    %1 = arith.extui %0 : i1 to i32
    %c0_i32_0 = arith.constant 0 : i32
    %2 = arith.cmpi ne, %1, %c0_i32_0 : i32
    scf.if %2 {
      %cst = arith.constant 0.000000e+00 : f32
      %62 = vector.broadcast %cst : f32 to vector<2x128xf32>
      %c0_51 = arith.constant 0 : index
      %c0_52 = arith.constant 0 : index
      %63 = vector.load %arg5[%c0_51, %c0_52] : memref<2x128xf32, #tpu.memory_space<vmem>>, vector<2x128xf32>
      tpu.vector_store %arg5[%c0_51, %c0_52], %62 {strides = array<i32>} : memref<2x128xf32, #tpu.memory_space<vmem>>, vector<2x128xf32>,
    } else {
    }
    %c0 = arith.constant 0 : index
    %c0_1 = arith.constant 0 : index
    %c0_2 = arith.constant 0 : index
    %c0_3 = arith.constant 0 : index
    %3 = vector.load %arg2[%c0, %c0_1, %c0_2, %c0_3] : memref<1x4x2x128xf32, #tpu.memory_space<vmem>>, vector<1x1x2x128xf32>
    %4 = vector.shape_cast %3 : vector<1x1x2x128xf32> to vector<2x128xf32>
    %c0_4 = arith.constant 0 : index
    %c1 = arith.constant 1 : index
    %c0_5 = arith.constant 0 : index
    %c0_6 = arith.constant 0 : index
    %5 = vector.load %arg2[%c0_4, %c1, %c0_5, %c0_6] : memref<1x4x2x128xf32, #tpu.memory_space<vmem>>, vector<1x1x2x128xf32>
    %6 = vector.shape_cast %5 : vector<1x1x2x128xf32> to vector<2x128xf32>
    %7 = arith.maximumf %4, %6 : vector<2x128xf32>
    %c0_7 = arith.constant 0 : index
    %c2 = arith.constant 2 : index
    %c0_8 = arith.constant 0 : index
    %c0_9 = arith.constant 0 : index
    %8 = vector.load %arg2[%c0_7, %c2, %c0_8, %c0_9] : memref<1x4x2x128xf32, #tpu.memory_space<vmem>>, vector<1x1x2x128xf32>
    %9 = vector.shape_cast %8 : vector<1x1x2x128xf32> to vector<2x128xf32>
    %10 = arith.maximumf %7, %9 : vector<2x128xf32>
    %c0_10 = arith.constant 0 : index
    %c3 = arith.constant 3 : index
    %c0_11 = arith.constant 0 : index
    %c0_12 = arith.constant 0 : index
    %11 = vector.load %arg2[%c0_10, %c3, %c0_11, %c0_12] : memref<1x4x2x128xf32, #tpu.memory_space<vmem>>, vector<1x1x2x128xf32>
    %12 = vector.shape_cast %11 : vector<1x1x2x128xf32> to vector<2x128xf32>
    %13 = arith.maximumf %10, %12 : vector<2x128xf32>
    %c0_13 = arith.constant 0 : index
    %c0_14 = arith.constant 0 : index
    %c0_15 = arith.constant 0 : index
    %c0_16 = arith.constant 0 : index
    %14 = vector.load %arg2[%c0_13, %c0_14, %c0_15, %c0_16] : memref<1x4x2x128xf32, #tpu.memory_space<vmem>>, vector<1x1x2x128xf32>
    %15 = vector.shape_cast %14 : vector<1x1x2x128xf32> to vector<2x128xf32>
    %16 = arith.subf %15, %13 : vector<2x128xf32>
    %17 = math.exp %16 : vector<2x128xf32>
    %c0_17 = arith.constant 0 : index
    %c0_18 = arith.constant 0 : index
    %c0_19 = arith.constant 0 : index
    %c0_20 = arith.constant 0 : index
    %18 = vector.load %arg3[%c0_17, %c0_18, %c0_19, %c0_20] : memref<1x4x2x128xf32, #tpu.memory_space<vmem>>, vector<1x1x2x128xf32>
    %19 = vector.shape_cast %18 : vector<1x1x2x128xf32> to vector<2x128xf32>
    %20 = arith.fptosi %19 : vector<2x128xf32> to vector<2x128xi32>
    %c0_21 = arith.constant 0 : index
    %c1_22 = arith.constant 1 : index
    %c0_23 = arith.constant 0 : index
    %c0_24 = arith.constant 0 : index
    %21 = vector.load %arg2[%c0_21, %c1_22, %c0_23, %c0_24] : memref<1x4x2x128xf32, #tpu.memory_space<vmem>>, vector<1x1x2x128xf32>
    %22 = vector.shape_cast %21 : vector<1x1x2x128xf32> to vector<2x128xf32>
    %23 = arith.subf %22, %13 : vector<2x128xf32>
    %24 = math.exp %23 : vector<2x128xf32>
    %25 = arith.addf %17, %24 : vector<2x128xf32>
    %c0_25 = arith.constant 0 : index
    %c1_26 = arith.constant 1 : index
    %c0_27 = arith.constant 0 : index
    %c0_28 = arith.constant 0 : index
    %26 = vector.load %arg3[%c0_25, %c1_26, %c0_27, %c0_28] : memref<1x4x2x128xf32, #tpu.memory_space<vmem>>, vector<1x1x2x128xf32>
    %27 = vector.shape_cast %26 : vector<1x1x2x128xf32> to vector<2x128xf32>
    %28 = arith.fptosi %27 : vector<2x128xf32> to vector<2x128xi32>
    %29 = arith.cmpi sgt, %28, %20 : vector<2x128xi32>
    %30 = arith.select %29, %28, %20 : vector<2x128xi1>, vector<2x128xi32>
    %31 = arith.select %29, %22, %15 : vector<2x128xi1>, vector<2x128xf32>
    %c0_29 = arith.constant 0 : index
    %c2_30 = arith.constant 2 : index
    %c0_31 = arith.constant 0 : index
    %c0_32 = arith.constant 0 : index
    %32 = vector.load %arg2[%c0_29, %c2_30, %c0_31, %c0_32] : memref<1x4x2x128xf32, #tpu.memory_space<vmem>>, vector<1x1x2x128xf32>
    %33 = vector.shape_cast %32 : vector<1x1x2x128xf32> to vector<2x128xf32>
    %34 = arith.subf %33, %13 : vector<2x128xf32>
    %35 = math.exp %34 : vector<2x128xf32>
    %36 = arith.addf %25, %35 : vector<2x128xf32>
    %c0_33 = arith.constant 0 : index
    %c2_34 = arith.constant 2 : index
    %c0_35 = arith.constant 0 : index
    %c0_36 = arith.constant 0 : index
    %37 = vector.load %arg3[%c0_33, %c2_34, %c0_35, %c0_36] : memref<1x4x2x128xf32, #tpu.memory_space<vmem>>, vector<1x1x2x128xf32>
    %38 = vector.shape_cast %37 : vector<1x1x2x128xf32> to vector<2x128xf32>
    %39 = arith.fptosi %38 : vector<2x128xf32> to vector<2x128xi32>
    %40 = arith.cmpi sgt, %39, %30 : vector<2x128xi32>
    %41 = arith.select %40, %39, %30 : vector<2x128xi1>, vector<2x128xi32>
    %42 = arith.select %40, %33, %31 : vector<2x128xi1>, vector<2x128xf32>
    %c0_37 = arith.constant 0 : index
    %c3_38 = arith.constant 3 : index
    %c0_39 = arith.constant 0 : index
    %c0_40 = arith.constant 0 : index
    %43 = vector.load %arg2[%c0_37, %c3_38, %c0_39, %c0_40] : memref<1x4x2x128xf32, #tpu.memory_space<vmem>>, vector<1x1x2x128xf32>
    %44 = vector.shape_cast %43 : vector<1x1x2x128xf32> to vector<2x128xf32>
    %45 = arith.subf %44, %13 : vector<2x128xf32>
    %46 = math.exp %45 : vector<2x128xf32>
    %47 = arith.addf %36, %46 : vector<2x128xf32>
    %c0_41 = arith.constant 0 : index
    %c3_42 = arith.constant 3 : index
    %c0_43 = arith.constant 0 : index
    %c0_44 = arith.constant 0 : index
    %48 = vector.load %arg3[%c0_41, %c3_42, %c0_43, %c0_44] : memref<1x4x2x128xf32, #tpu.memory_space<vmem>>, vector<1x1x2x128xf32>
    %49 = vector.shape_cast %48 : vector<1x1x2x128xf32> to vector<2x128xf32>
    %50 = arith.fptosi %49 : vector<2x128xf32> to vector<2x128xi32>
    %51 = arith.cmpi sgt, %50, %41 : vector<2x128xi32>
    %52 = arith.select %51, %44, %42 : vector<2x128xi1>, vector<2x128xf32>
    %53 = math.log %47 : vector<2x128xf32>
    %54 = arith.addf %13, %53 : vector<2x128xf32>
    %55 = arith.subf %54, %52 : vector<2x128xf32>
    %c0_45 = arith.constant 0 : index
    %c0_46 = arith.constant 0 : index
    %56 = vector.load %arg5[%c0_45, %c0_46] : memref<2x128xf32, #tpu.memory_space<vmem>>, vector<2x128xf32>
    %57 = arith.addf %56, %55 : vector<2x128xf32>
    %c0_47 = arith.constant 0 : index
    %c0_48 = arith.constant 0 : index
    %58 = vector.load %arg5[%c0_47, %c0_48] : memref<2x128xf32, #tpu.memory_space<vmem>>, vector<2x128xf32>
    tpu.vector_store %arg5[%c0_47, %c0_48], %57 {strides = array<i32>} : memref<2x128xf32, #tpu.memory_space<vmem>>, vector<2x128xf32>,
    %c0_i32_49 = arith.constant 0 : i32
    %59 = arith.cmpi eq, %arg1, %c0_i32_49 : i32
    %60 = arith.extui %59 : i1 to i32
    %c0_i32_50 = arith.constant 0 : i32
    %61 = arith.cmpi ne, %60, %c0_i32_50 : i32
    scf.if %61 {
      %c0_51 = arith.constant 0 : index
      %c0_52 = arith.constant 0 : index
      %62 = vector.load %arg5[%c0_51, %c0_52] : memref<2x128xf32, #tpu.memory_space<vmem>>, vector<2x128xf32>
      %63 = vector.shape_cast %62 : vector<2x128xf32> to vector<1x2x128xf32>
      %cst = arith.constant dense<0.000000e+00> : vector<1xf32>
      %64 = vector.multi_reduction <add>, %63, %cst [1, 2] : vector<1x2x128xf32> to vector<1xf32>
      %65 = vector.shape_cast %64 : vector<1xf32> to vector<1x1x1xf32>
      %66 = vector.extract %65[0, 0, 0] : f32 from vector<1x1x1xf32>
      %67 = vector.broadcast %66 : f32 to vector<1x1xf32>
      %68 = vector.shape_cast %67 : vector<1x1xf32> to vector<1x1x1xf32>
      %c0_53 = arith.constant 0 : index
      %c0_54 = arith.constant 0 : index
      %c0_55 = arith.constant 0 : index
      %69 = vector.load %arg4[%c0_53, %c0_54, %c0_55] : memref<1x1x1xf32, #tpu.memory_space<vmem>>, vector<1x1x1xf32>
      tpu.vector_store %arg4[%c0_53, %c0_54, %c0_55], %68 {strides = array<i32>} : memref<1x1x1xf32, #tpu.memory_space<vmem>>, vector<1x1x1xf32>,
    } else {
    }
    return
  }
  func.func @transform_0(%arg0: i32, %arg1: i32) -> (i32, i32, i32, i32) {
    %c0_i32 = arith.constant 0 : i32
    %c0_i32_0 = arith.constant 0 : i32
    %c0_i32_1 = arith.constant 0 : i32
    return %arg0, %c0_i32, %arg1, %c0_i32_0 : i32, i32, i32, i32
  }
  func.func @transform_1(%arg0: i32, %arg1: i32) -> (i32, i32, i32, i32) {
    %c0_i32 = arith.constant 0 : i32
    %c0_i32_0 = arith.constant 0 : i32
    %c0_i32_1 = arith.constant 0 : i32
    return %arg0, %c0_i32, %arg1, %c0_i32_0 : i32, i32, i32, i32
  }
  func.func @transform_2(%arg0: i32, %arg1: i32) -> (i32, i32, i32) {
    %c0_i32 = arith.constant 0 : i32
    %c0_i32_0 = arith.constant 0 : i32
    %c0_i32_1 = arith.constant 0 : i32
    return %arg0, %c0_i32, %c0_i32_0 : i32, i32, i32
  }
}

</mosaic_0001>

<llo_original>
// kernel: tpu_custom_call.1
$region0: #{tpu_custom_call.1}
  #allocation0 [shape = 'u32[]', space=smem, size = 0x4, offset = 0x4, fixed_abs, tag = 'smem constant byte address 0x4 - core index']
  #allocation1 [shape = 'u32[144,128]{1,0:T(1,128)}', space=vmem, size = 0x12000, scoped, tag = 'internal scratch']
  #allocation2 [shape = 'f32[2,128]{1,0:T(2,128)}', space=vmem, size = 0x400, scoped, tag = 'scratch operand']
  %s0 = inlined_call_operand.hbm [shape: f32[2,4,2,128], index: 0, kind: input, shape index: {}]
  %s1 = inlined_call_operand.hbm [shape: f32[2,4,2,128], index: 1, kind: input, shape index: {}]
  %s2 = inlined_call_operand.vmem [shape: f32[2,1,1], index: 2, kind: output, shape index: {}]
  %s3 = sld [smem:[#allocation0]]
  $region57: #{tpu_custom_call.1} parent=0
    _
  %s5 = ssub.s32 1, %s3
  %s6 = scalar_select 0, %s5, %s3
  $region1: #{tpu_custom_call.1} parent=0
    #allocation3 [shape = 'u8[8192]{0}', space=vmem, size = 0x2000, scoped, tag = 'input window, operand 0']
    #allocation4 [shape = 's32[2]{0}', space=sflag, size = 0x8, scoped, tag = 'scoped memory for tpu_custom_call.1']
    #allocation5 [shape = 'u8[8192]{0}', space=vmem, size = 0x2000, scoped, tag = 'input window, operand 1']
    #allocation6 [shape = 's32[2]{0}', space=sflag, size = 0x8, scoped, tag = 'scoped memory for tpu_custom_call.1']
    %7 = vsyncpa [#allocation4], 0
    %s8 = scalar_lea.sflag [#allocation4], 1
    %9 = vsyncpa %s8, 0
    %10 = vsyncpa [#allocation6], 0
    %s11 = scalar_lea.sflag [#allocation6], 1
    %12 = vsyncpa %s11, 0
    loop: start=0, step=1, limit=4
    $region2: #{tpu_custom_call.1} parent=1 // loop_pre_header
      _
    $region3: #{tpu_custom_call.1} parent=1 // loop_header
      %s14 = sphi 0, %s18
      %p15 = scmp.ge.s32.totalorder %s14, 4
      %s21 = sphi 0, %s33
      %s22 = sphi 0, %s29
      %s23 = sphi 0, %s21
      %s24 = sphi 0, %s22
      %s25 = sphi 0, %s23
      %s26 = sphi 0, %s24
      %s38 = sphi 0, %s40
      %s41 = sphi 0, %s38
      %s42 = sphi 0, %s41
      %s58 = sphi 0, %s42
      %s66 = sphi 0, %s68
      %s69 = sphi 0, %s66
      %s70 = sphi 0, %s69
      %s86 = sphi 0, %s70
      %s92 = sphi 0, %s94
      %s95 = sphi 0, %s92
      %s96 = sphi 0, %s95
      %s112 = sphi 0, %s96
    $region4: #{tpu_custom_call.1} parent=1 // loop_header_branch
      %17 = sbr.rel (%p15) target = $region8
    $region5: #{tpu_custom_call.1} parent=1 // loop_body
      %s19 = ssub.s32 %s14, 1
      %s20 = ssub.s32 %s14, 2
      %s27 = sadd.s32 1, %s22
      %p28 = scmp.ge.s32.totalorder %s27, 1
      %s29 = scalar_select %p28, 0, %s27
      %s30 = sadd.s32 1, %s21
      %s31 = scalar_select %p28, %s30, %s21
      %p32 = scmp.ge.s32.totalorder %s31, 2
      %s33 = scalar_select %p32, 0, %s31
      %s34 = ssub.s32 %s21, %s33
      %s35 = ssub.s32 %s22, %s29
      %s36 = sor.u32 %s34, %s35
      %p37 = scmp.eq.s32.totalorder %s36, 0
      %s39 = sadd.s32 %s38, 1
      %s40 = scalar_select %p37, %s38, %s39
      %p43 = pneg %p37
      %p44 = scmp.eq.s32.totalorder %s14, 1
      %p45 = por %p43, %p44
      %p46 = scmp.ne.s32.totalorder %s38, %s41
      %p47 = scmp.eq.s32.totalorder %s14, 0
      %p48 = por %p46, %p47
      %p49 = scmp.ne.s32.totalorder %s38, %s41
      %p50 = scmp.eq.s32.totalorder %s19, 1
      %p51 = por %p49, %p50
      %p52 = scmp.ne.s32.totalorder %s41, %s42
      %p53 = scmp.eq.s32.totalorder %s19, 0
      %p54 = por %p52, %p53
      %p55 = scmp.ne.s32.totalorder %s41, %s42
      %p56 = scmp.eq.s32.totalorder %s20, 1
      %p57 = por %p55, %p56
      %p59 = scmp.ne.s32.totalorder %s42, %s58
      %p60 = scmp.eq.s32.totalorder %s20, 0
      %p61 = por %p59, %p60
      %s62 = ssub.s32 %s21, %s33
      %s63 = ssub.s32 %s22, %s29
      %s64 = sor.u32 %s62, %s63
      %p65 = scmp.eq.s32.totalorder %s64, 0
      %s67 = sadd.s32 %s66, 1
      %s68 = scalar_select %p65, %s66, %s67
      %p71 = pneg %p65
      %p72 = scmp.eq.s32.totalorder %s14, 1
      %p73 = por %p71, %p72
      %p74 = scmp.ne.s32.totalorder %s66, %s69
      %p75 = scmp.eq.s32.totalorder %s14, 0
      %p76 = por %p74, %p75
      %p77 = scmp.ne.s32.totalorder %s66, %s69
      %p78 = scmp.eq.s32.totalorder %s19, 1
      %p79 = por %p77, %p78
      %p80 = scmp.ne.s32.totalorder %s69, %s70
      %p81 = scmp.eq.s32.totalorder %s19, 0
      %p82 = por %p80, %p81
      %p83 = scmp.ne.s32.totalorder %s69, %s70
      %p84 = scmp.eq.s32.totalorder %s20, 1
      %p85 = por %p83, %p84
      %p87 = scmp.ne.s32.totalorder %s70, %s86
      %p88 = scmp.eq.s32.totalorder %s20, 0
      %p89 = por %p87, %p88
      %s90 = ssub.s32 %s21, %s33
      %p91 = scmp.eq.s32.totalorder %s90, 0
      %s93 = sadd.s32 %s92, 1
      %s94 = scalar_select %p91, %s92, %s93
      %p97 = pneg %p91
      %p98 = scmp.eq.s32.totalorder %s14, 1
      %p99 = por %p97, %p98
      %p100 = scmp.ne.s32.totalorder %s92, %s95
      %p101 = scmp.eq.s32.totalorder %s14, 0
      %p102 = por %p100, %p101
      %p103 = scmp.ne.s32.totalorder %s92, %s95
      %p104 = scmp.eq.s32.totalorder %s19, 1
      %p105 = por %p103, %p104
      %p106 = scmp.ne.s32.totalorder %s95, %s96
      %p107 = scmp.eq.s32.totalorder %s19, 0
      %p108 = por %p106, %p107
      %p109 = scmp.ne.s32.totalorder %s95, %s96
      %p110 = scmp.eq.s32.totalorder %s20, 1
      %p111 = por %p109, %p110
      %p113 = scmp.ne.s32.totalorder %s96, %s112
      %p114 = scmp.eq.s32.totalorder %s20, 0
      %p115 = por %p113, %p114
      %p116 = scmp.le.s32.totalorder 1, %s14
      %p117 = scmp.lt.s32.totalorder %s14, 3
      %p118 = pnand %p116, %p117
      %p119 = pneg %p118
      // Predicated region
      $region9: #{tpu_custom_call.1} parent=5 // pred_check
        _
      $region10: #{tpu_custom_call.1} parent=5 // pred_check_branch
        %121 = sbr.rel (%p118) target = $region12
      $region11: #{tpu_custom_call.1} parent=5 // pred_region
        %s122 = ssub.s32 %s14, 1
      $region12: #{tpu_custom_call.1} parent=5 // pred_fallthru
        _
      %p123 = scmp.lt.s32.totalorder %s14, 2
      // Predicated region
      $region13: #{tpu_custom_call.1} parent=5 // pred_check
        %p124 = pneg %p123
      $region14: #{tpu_custom_call.1} parent=5 // pred_check_branch
        %126 = sbr.rel (%p124) target = $region16
      $region15: #{tpu_custom_call.1} parent=5 // pred_region
        // Predicated region
        $region17: #{tpu_custom_call.1} parent=15 // pred_check
          %p127 = pneg %p48
        $region18: #{tpu_custom_call.1} parent=15 // pred_check_branch
          %129 = sbr.rel (%p127) target = $region20
        $region19: #{tpu_custom_call.1} parent=15 // pred_region
          %s130 = sand.u32 %s38, 1
          %s131 = scalar_lea.sflag [#allocation4], %s130
          %s132 = sand.u32 %s38, 1
          %s133 = smul.addr %s132, 8
          %s134 = scalar_lea.vmem [#allocation3], %s133
          %s136 = ssub.s32 128, 128
          %137 = vsyncadd %s131, %s136
          %s138 = smul.addr %s21, 4
          %s139 = sadd.s32 %s22, %s138
          %s140 = smul.addr %s139, 32
          %s141 = scalar_lea.hbm %s0, %s140
          %s142 = sshll.u32 %s134, 4
          %s143 = int_to_ptr.vmem [resolvable:$true] %s142
          %148 = dma.hbm_to_vmem [thread:$0]  %s141, 128, %s143, %s131, 32, 32, 2
        $region20: #{tpu_custom_call.1} parent=15 // pred_fallthru
          _
        // Predicated region
        $region21: #{tpu_custom_call.1} parent=15 // pred_check
          %p149 = pneg %p76
        $region22: #{tpu_custom_call.1} parent=15 // pred_check_branch
          %151 = sbr.rel (%p149) target = $region24
        $region23: #{tpu_custom_call.1} parent=15 // pred_region
          %s152 = sand.u32 %s66, 1
          %s153 = scalar_lea.sflag [#allocation6], %s152
          %s154 = sand.u32 %s66, 1
          %s155 = smul.addr %s154, 8
          %s156 = scalar_lea.vmem [#allocation5], %s155
          %s158 = ssub.s32 128, 128
          %159 = vsyncadd %s153, %s158
          %s160 = smul.addr %s21, 4
          %s161 = sadd.s32 %s22, %s160
          %s162 = smul.addr %s161, 32
          %s163 = scalar_lea.hbm %s1, %s162
          %s164 = sshll.u32 %s156, 4
          %s165 = int_to_ptr.vmem [resolvable:$true] %s164
          %170 = dma.hbm_to_vmem [thread:$0]  %s163, 128, %s165, %s153, 32, 32, 2
        $region24: #{tpu_custom_call.1} parent=15 // pred_fallthru
          _
      $region16: #{tpu_custom_call.1} parent=5 // pred_fallthru
        _
      %p171 = scmp.le.s32.totalorder 1, %s14
      %p172 = scmp.lt.s32.totalorder %s14, 3
      %p173 = pnand %p171, %p172
      %p174 = pneg %p173
      // Predicated region
      $region25: #{tpu_custom_call.1} parent=5 // pred_check
        _
      $region26: #{tpu_custom_call.1} parent=5 // pred_check_branch
        %176 = sbr.rel (%p173) target = $region28
      $region27: #{tpu_custom_call.1} parent=5 // pred_region
        %s177 = ssub.s32 %s14, 1
        %s178 = sand.u32 %s41, 1
        %s179 = scalar_lea.sflag [#allocation4], %s178
        %s180 = sand.u32 %s41, 1
        %s181 = smul.addr %s180, 8
        %s182 = scalar_lea.vmem [#allocation3], %s181
        // Predicated region
        $region29: #{tpu_custom_call.1} parent=27 // pred_check
          %p183 = pneg %p54
        $region30: #{tpu_custom_call.1} parent=27 // pred_check_branch
          %185 = sbr.rel (%p183) target = $region32
        $region31: #{tpu_custom_call.1} parent=27 // pred_region
          %186 = dma.done %s179, 128
        $region32: #{tpu_custom_call.1} parent=27 // pred_fallthru
          _
        %s187 = sand.u32 %s69, 1
        %s188 = scalar_lea.sflag [#allocation6], %s187
        %s189 = sand.u32 %s69, 1
        %s190 = smul.addr %s189, 8
        %s191 = scalar_lea.vmem [#allocation5], %s190
        // Predicated region
        $region33: #{tpu_custom_call.1} parent=27 // pred_check
          %p192 = pneg %p82
        $region34: #{tpu_custom_call.1} parent=27 // pred_check_branch
          %194 = sbr.rel (%p192) target = $region36
        $region35: #{tpu_custom_call.1} parent=27 // pred_region
          %195 = dma.done %s188, 128
        $region36: #{tpu_custom_call.1} parent=27 // pred_fallthru
          _
        %s196 = sand.u32 %s41, 1
        %s197 = scalar_lea.sflag [#allocation4], %s196
        %s198 = sand.u32 %s41, 1
        %s199 = smul.addr %s198, 8
        %s200 = scalar_lea.vmem [#allocation3], %s199
        %p201 = pneg %p54
        %p202 = pneg %p51
        %s203 = sand.u32 %s69, 1
        %s204 = scalar_lea.sflag [#allocation6], %s203
        %s205 = sand.u32 %s69, 1
        %s206 = smul.addr %s205, 8
        %s207 = scalar_lea.vmem [#allocation5], %s206
        %p208 = pneg %p82
        %p209 = pneg %p79
        %p210 = pneg %p108
        %p211 = pneg %p105
        %p212 = scmp.lt.s32.totalorder %s23, 1
        %s213 = scalar_select %p212, %s23, 1
        %s214 = scalar_lea.vmem %s2, %s213
        %p215 = scmp.lt.s32.totalorder %s23, 1
        %s216 = scalar_select %p215, %s23, 1
        %s217 = scalar_lea.vmem %s2, %s216
        %p218 = scmp.eq.s32.totalorder %s24, 0
        // Predicated region
        $region37: #{tpu_custom_call.1} parent=27 // pred_check
          %p219 = pneg %p218
        $region38: #{tpu_custom_call.1} parent=27 // pred_check_branch
          %221 = sbr.rel (%p219) target = $region40
        $region39: #{tpu_custom_call.1} parent=27 // pred_region
          %222 = vst [vmem:[#allocation2] sm:$0x3] 0.0
        $region40: #{tpu_custom_call.1} parent=27 // pred_fallthru
          _
        %v223 = vld [vmem:[%s182] sm:$0x3]
        %s224 = scalar_lea.vmem %s182, 2 [#allocation3]
        %v225 = vld [vmem:[%s224] sm:$0x3]
        %v226 = vmax.f32 %v223, %v225
        %s227 = scalar_lea.vmem %s182, 4 [#allocation3]
        %v228 = vld [vmem:[%s227] sm:$0x3]
        %v229 = vmax.f32 %v226, %v228
        %s230 = scalar_lea.vmem %s182, 6 [#allocation3]
        %v231 = vld [vmem:[%s230] sm:$0x3]
        %v232 = vmax.f32 %v229, %v231
        %v233 = vsub.f32 %v223, %v232
        %v234 = vmul.f32 %v233, 1.442695
        %v235 = vpow.pop %v234
        %v236 = vld [vmem:[%s191] sm:$0x3]
        %v237 = vcvt.f32.s32.to.zero.pseudo %v236
        %v238 = vsub.f32 %v225, %v232
        %v239 = vmul.f32 %v238, 1.442695
        %v240 = vpow.pop %v239
        %v241 = vadd.f32 %v235, %v240
        %s242 = scalar_lea.vmem %s191, 2 [#allocation5]
        %v243 = vld [vmem:[%s242] sm:$0x3]
        %v244 = vcvt.f32.s32.to.zero.pseudo %v243
        %vm245 = vcmp.gt.s32.totalorder %v244, %v237
        %v246 = vsel %vm245, %v244, %v237
        %v247 = vsel %vm245, %v225, %v223
        %v248 = vsub.f32 %v228, %v232
        %v249 = vmul.f32 %v248, 1.442695
        %v250 = vpow.pop %v249
        %v251 = vadd.f32 %v241, %v250
        %s252 = scalar_lea.vmem %s191, 4 [#allocation5]
        %v253 = vld [vmem:[%s252] sm:$0x3]
        %v254 = vcvt.f32.s32.to.zero.pseudo %v253
        %vm255 = vcmp.gt.s32.totalorder %v254, %v246
        %v256 = vsel %vm255, %v254, %v246
        %v257 = vsel %vm255, %v228, %v247
        %v258 = vsub.f32 %v231, %v232
        %v259 = vmul.f32 %v258, 1.442695
        %v260 = vpow.pop %v259
        %v261 = vadd.f32 %v251, %v260
        %s262 = scalar_lea.vmem %s191, 6 [#allocation5]
        %v263 = vld [vmem:[%s262] sm:$0x3]
        %v264 = vcvt.f32.s32.to.zero.pseudo %v263
        %vm265 = vcmp.gt.s32.totalorder %v264, %v256
        %v266 = vsel %vm265, %v231, %v257
        %v267 = vlog2.pop %v261
        %v268 = vmul.f32 %v267, 0.6931472
        %v269 = vadd.f32 %v232, %v268
        %v270 = vsub.f32 %v269, %v266
        %v271 = vld [vmem:[#allocation2] sm:$0x3]
        %v272 = vadd.f32 %v271, %v270
        %273 = vst [vmem:[#allocation2] sm:$0x3] %v272
        // Predicated region
        $region41: #{tpu_custom_call.1} parent=27 // pred_check
          %p274 = pneg %p218
        $region42: #{tpu_custom_call.1} parent=27 // pred_check_branch
          %276 = sbr.rel (%p274) target = $region44
        $region43: #{tpu_custom_call.1} parent=27 // pred_region
          %v277 = vld [vmem:[#allocation2] sm:$0x3]
          %vm278 = vcmask 1041408
          %v279 = vsel %vm278, %v277, 0.0
          %280 = vadd.xlane.f32.xlu0 %v279
          %v281 = vpop.xlane.xlu0 %280
          %v282 = vrot.slane %v281, 4
          %v283 = vadd.f32 %v281, %v282
          %v284 = vrot.slane %v283, 2
          %v285 = vadd.f32 %v283, %v284
          %v286 = vrot.slane %v285, 1
          %v287 = vadd.f32 %v285, %v286
          %s288 = vtos %v287
          %v289 = vstv %s288
          %vm290 = vcmask 0
          %291 = vst.msk [vmem:[%s217] sm:$0x1] %vm290, %v289
        $region44: #{tpu_custom_call.1} parent=27 // pred_fallthru
          _
        %p292 = scmp.lt.s32.totalorder %s23, 1
        %s293 = scalar_select %p292, %s23, 1
        %s294 = scalar_lea.vmem %s2, %s293
        // Predicated region
        $region45: #{tpu_custom_call.1} parent=27 // pred_check
          %p295 = pneg %p105
        $region46: #{tpu_custom_call.1} parent=27 // pred_check_branch
          %297 = sbr.rel (%p295) target = $region48
        $region47: #{tpu_custom_call.1} parent=27 // pred_region
          _
        $region48: #{tpu_custom_call.1} parent=27 // pred_fallthru
          _
      $region28: #{tpu_custom_call.1} parent=5 // pred_fallthru
        _
      %p298 = scmp.le.s32.totalorder 2, %s14
      // Predicated region
      $region49: #{tpu_custom_call.1} parent=5 // pred_check
        %p299 = pneg %p298
      $region50: #{tpu_custom_call.1} parent=5 // pred_check_branch
        %301 = sbr.rel (%p299) target = $region52
      $region51: #{tpu_custom_call.1} parent=5 // pred_region
        %s302 = ssub.s32 %s14, 2
        // Predicated region
        $region53: #{tpu_custom_call.1} parent=51 // pred_check
          %p303 = pneg %p111
        $region54: #{tpu_custom_call.1} parent=51 // pred_check_branch
          %305 = sbr.rel (%p303) target = $region56
        $region55: #{tpu_custom_call.1} parent=51 // pred_region
          %p306 = scmp.lt.s32.totalorder %s25, 1
          %s307 = scalar_select %p306, %s25, 1
          %s308 = scalar_lea.vmem %s2, %s307
        $region56: #{tpu_custom_call.1} parent=51 // pred_fallthru
          _
      $region52: #{tpu_custom_call.1} parent=5 // pred_fallthru
        _
    $region6: #{tpu_custom_call.1} parent=1 // loop_footer
      %s18 = sadd.s32 1, %s14
    $region7: #{tpu_custom_call.1} parent=1 // loop_footer_branch
      %13 = sbr.rel target = $region3
    $region8: #{tpu_custom_call.1} parent=1 // loop_exit
      _
    %309 = vsyncpa [#allocation4], 1
    %s310 = scalar_lea.sflag [#allocation4], 1
    %311 = vsyncpa %s310, 1
    %312 = vsyncpa [#allocation6], 1
    %s313 = scalar_lea.sflag [#allocation6], 1
    %314 = vsyncpa %s313, 1

</llo_original>
